<compile_context>
chip_gen: v7x
topology: tpu7x:2x2x1
jax: 0.10.0
libtpu: 0.0.40
codegen_flags: <defaults>
</compile_context>

<pallas_src>
import functools

import jax
import jax.numpy as jnp
from jax.experimental import pallas as pl
from jax.experimental.pallas import tpu as pltpu


def _round_up(x, m):
    return (x + m - 1) // m * m


# ----------------------------------------------------------------------------
# Kernel body
# ----------------------------------------------------------------------------
def _make_mlp_kernel(num_layers):
    """Builds kernel: refs = (x, w0, b0, w1, b1, ..., w_{L-1}, b_{L-1}, out)."""

    def kernel(*refs):
        x_ref = refs[0]
        o_ref = refs[-1]
        param_refs = refs[1:-1]

        h = x_ref[...]  # native dtype; MXU handles bf16/f32 directly
        for i in range(num_layers):
            w = param_refs[2 * i][...]
            b = param_refs[2 * i + 1][...]
            if h.dtype != w.dtype:
                # Only triggers when the f32 accumulator meets low-precision
                # weights; a no-op in the all-f32 case.
                h = h.astype(w.dtype)
            h = jnp.dot(h, w, preferred_element_type=jnp.float32)
            h = h + b.astype(jnp.float32)  # bias add / ReLU stay in f32 (VPU)
            if i < num_layers - 1:  # ReLU between hidden layers, none at end
                h = jnp.maximum(h, 0.0)
        o_ref[...] = h.astype(o_ref.dtype)

    return kernel


# ----------------------------------------------------------------------------
# Module init helpers (mirror Projection.__init__)
# ----------------------------------------------------------------------------
def projection_layer_dims(in_dim, out_dim, num_layers):
    """Replicates the dim schedule from Projection.__init__."""
    diff_dim = (out_dim - in_dim) // num_layers
    dims = []
    dim = in_dim
    for _ in range(num_layers - 1):
        dims.append((dim, dim + diff_dim))
        dim += diff_dim
    dims.append((dim, out_dim))
    return dims


def init_projection_params(key, in_dim, out_dim, num_layers, dtype=jnp.float32):
    """Deterministic init mimicking nn.Linear's default U(-1/sqrt(fan_in), .)."""
    params = []
    for (fi, fo) in projection_layer_dims(in_dim, out_dim, num_layers):
        key, kw, kb = jax.random.split(key, 3)
        bound = 1.0 / (fi ** 0.5)
        w = jax.random.uniform(kw, (fi, fo), dtype, minval=-bound, maxval=bound)
        b = jax.random.uniform(kb, (1, fo), dtype, minval=-bound, maxval=bound)
        params.append((w, b))
    return params


def prepare_projection_params(flat_params):
    """One-time (init-time) lane-dense padding of weights & biases.

    Layer 0 keeps its original fan_in (x is fed unpadded); every fan_out is
    padded to a multiple of 128 and each subsequent layer's fan_in is padded
    to match the previous layer's padded fan_out.  Zero padding is numerically
    inert (padded channels stay 0 through bias-add and ReLU, and padded fan_in
    rows are zero).
    """
    num_layers = len(flat_params) // 2
    padded = []
    prev_fo_p = None
    for li in range(num_layers):
        w = flat_params[2 * li]
        b = flat_params[2 * li + 1]
        fi, fo = w.shape
        fi_p = fi if li == 0 else prev_fo_p
        fo_p = _round_up(fo, 128)
        w_p = jnp.pad(w, ((0, fi_p - fi), (0, fo_p - fo)))
        b_p = jnp.pad(jnp.reshape(b, (1, fo)), ((0, 0), (0, fo_p - fo)))
        padded += [w_p, b_p]
        prev_fo_p = fo_p
    return tuple(padded)


# ----------------------------------------------------------------------------
# Tiling heuristics
# ----------------------------------------------------------------------------
def _choose_batch_tile(batch, block_batch, sublane):
    """Sublane-aligned, balanced batch tile; >=2 tiles when possible (v7x);
    256-aligned when large (feeds v6e/v7x 256-wide MXU full tiles)."""
    if batch <= sublane:
        return _round_up(batch, sublane)
    n_tiles = max(-(-batch // block_batch), 2)  # at least 2 grid steps
    tb = _round_up(-(-batch // n_tiles), sublane)
    if tb >= 256:
        tb = _round_up(tb, 256)
    return min(tb, block_batch)


# ----------------------------------------------------------------------------
# Forward
# ----------------------------------------------------------------------------
@functools.partial(
    jax.jit, static_argnames=("num_layers", "out_dim", "block_batch")
)
def projection_forward(x, padded_flat_params, *, num_layers, out_dim,
                       block_batch=512):
    batch, in_dim = x.shape
    out_dim_p = padded_flat_params[2 * (num_layers - 1)].shape[1]
    itemsize = jnp.dtype(x.dtype).itemsize
    sublane = max(8, 32 // itemsize)  # 8 for f32, 16 for bf16, 32 for int8

    # --- batch tile + VMEM budgeting ---------------------------------------
    tb = _choose_batch_tile(batch, block_batch, sublane)

    param_bytes = sum(int(p.size) * p.dtype.itemsize for p in padded_flat_params)
    max_dim_p = max(
        [in_dim] + [int(padded_flat_params[2 * li].shape[1])
                    for li in range(num_layers)]
    )

    def _footprint(t):
        # double-buffered x / out tiles + (double-buffered) resident params
        # + f32 intermediates headroom.
        act = 2 * t * in_dim * itemsize + 2 * t * out_dim_p * itemsize
        inter = 2 * t * max_dim_p * 4
        return act + 2 * param_bytes + inter

    vmem_budget = 40 << 20  # safe under v7x's 64 MiB physical VMEM
    while _footprint(tb) > vmem_budget and tb > sublane:
        tb = max(sublane, _round_up(tb // 2, sublane))
    vmem_limit_bytes = int(min(48 << 20,
                               max(32 << 20, _footprint(tb) + (8 << 20))))

    # --- grid / specs: no batch padding, ragged last tile is masked ---------
    grid = (pl.cdiv(batch, tb),)

    in_specs = [pl.BlockSpec((tb, in_dim), lambda i: (i, 0))]
    for li in range(num_layers):
        w = padded_flat_params[2 * li]
        b = padded_flat_params[2 * li + 1]
        # Constant index_map -> params stay VMEM-resident across grid steps.
        in_specs += [
            pl.BlockSpec(w.shape, lambda i: (0, 0)),
            pl.BlockSpec(b.shape, lambda i: (0, 0)),
        ]
    out_spec = pl.BlockSpec((tb, out_dim_p), lambda i: (i, 0))

    # --- cost estimate (helps XLA schedule around the custom call) ----------
    flops = 0
    for li in range(num_layers):
        fi_p, fo_p = padded_flat_params[2 * li].shape
        flops += 2 * batch * int(fi_p) * int(fo_p)
    bytes_accessed = batch * (in_dim + out_dim_p) * itemsize + param_bytes
    cost = pl.CostEstimate(flops=flops, transcendentals=0,
                           bytes_accessed=bytes_accessed)

    out = pl.pallas_call(
        _make_mlp_kernel(num_layers),
        out_shape=jax.ShapeDtypeStruct((batch, out_dim_p), x.dtype),
        grid=grid,
        in_specs=in_specs,
        out_specs=out_spec,
        compiler_params=pltpu.CompilerParams(
            # Batch tiles are independent -> megacore sharding on v7x,
            # harmless on single-TC v5e/v6e.
            dimension_semantics=("parallel",),
            vmem_limit_bytes=vmem_limit_bytes,
        ),
        cost_estimate=cost,
    )(x, *padded_flat_params)

    if out_dim_p != out_dim:
        out = out[:, :out_dim]
    return out


def projection_reference(x, params):
    """Pure-JAX reference for correctness checking."""
    h = x
    for i, (w, b) in enumerate(params):
        h = h @ w + b
        if i < len(params) - 1:
            h = jnp.maximum(h, 0.0)
    return h


if __name__ == "__main__":
    # Small shapes consistent with the module: an MLP projection head.
    batch = 8
    in_dim = 32
    out_dim = 128
    num_layers = 3  # -> Linear(32,64)+ReLU, Linear(64,96)+ReLU, Linear(96,128)

    key = jax.random.PRNGKey(0)
    key, kx = jax.random.split(key)
    x = jax.random.normal(kx, (batch, in_dim), jnp.float32)

    params = init_projection_params(key, in_dim, out_dim, num_layers)
    flat_params = tuple(p for wb in params for p in wb)

    # One-time, init-time parameter padding (hoisted out of the forward pass).
    padded_flat_params = prepare_projection_params(flat_params)
    padded_flat_params = jax.block_until_ready(padded_flat_params)

    out = projection_forward(
        x, padded_flat_params, num_layers=num_layers, out_dim=out_dim
    )
    out = jax.block_until_ready(out)

    ref = projection_reference(x, params)
    assert out.shape == (batch, out_dim), out.shape
    assert jnp.allclose(out, ref, atol=1e-5, rtol=1e-5), "mismatch vs reference"

    print("KERNEL_OK")
</pallas_src>

<mosaic_0001>
module attributes {stable_mosaic.version = 11 : i64} {
  func.func @kernel(%arg0: i32, %arg1: memref<8x32xf32, #tpu.memory_space<vmem>>, %arg2: memref<32x128xf32, #tpu.memory_space<vmem>>, %arg3: memref<1x128xf32, #tpu.memory_space<vmem>>, %arg4: memref<128x128xf32, #tpu.memory_space<vmem>>, %arg5: memref<1x128xf32, #tpu.memory_space<vmem>>, %arg6: memref<128x128xf32, #tpu.memory_space<vmem>>, %arg7: memref<1x128xf32, #tpu.memory_space<vmem>>, %arg8: memref<8x128xf32, #tpu.memory_space<vmem>>) attributes {dimension_semantics = [#tpu.dimension_semantics<parallel>], iteration_bounds = array<i64: 1>, scalar_prefetch = 0 : i64, scratch_operands = 0 : i64, tpu.core_type = #tpu.core_type<tc>, window_params = [{transform_indices = @transform_0, window_bounds = array<i64: 8, 32>}, {pipeline_mode = #tpu.pipeline_mode<synchronous>, transform_indices = @transform_1, window_bounds = array<i64: 32, 128>}, {pipeline_mode = #tpu.pipeline_mode<synchronous>, transform_indices = @transform_2, window_bounds = array<i64: 1, 128>}, {pipeline_mode = #tpu.pipeline_mode<synchronous>, transform_indices = @transform_3, window_bounds = array<i64: 128, 128>}, {pipeline_mode = #tpu.pipeline_mode<synchronous>, transform_indices = @transform_4, window_bounds = array<i64: 1, 128>}, {pipeline_mode = #tpu.pipeline_mode<synchronous>, transform_indices = @transform_5, window_bounds = array<i64: 128, 128>}, {pipeline_mode = #tpu.pipeline_mode<synchronous>, transform_indices = @transform_6, window_bounds = array<i64: 1, 128>}, {transform_indices = @transform_7, window_bounds = array<i64: 8, 128>}]} {
    %c0 = arith.constant 0 : index
    %c0_0 = arith.constant 0 : index
    %0 = vector.load %arg1[%c0, %c0_0] : memref<8x32xf32, #tpu.memory_space<vmem>>, vector<8x32xf32>
    %c0_1 = arith.constant 0 : index
    %c0_2 = arith.constant 0 : index
    %1 = vector.load %arg2[%c0_1, %c0_2] : memref<32x128xf32, #tpu.memory_space<vmem>>, vector<32x128xf32>
    %c0_3 = arith.constant 0 : index
    %c0_4 = arith.constant 0 : index
    %2 = vector.load %arg3[%c0_3, %c0_4] : memref<1x128xf32, #tpu.memory_space<vmem>>, vector<1x128xf32>
    %cst = arith.constant dense<0.000000e+00> : vector<8x128xf32>
    %3 = tpu.matmul %0, %1, %cst {dimension_numbers = #tpu.dot_dimension_numbers<[1], [0], [0], [1], [0, 0, 1, 1], [], []>} : vector<8x32xf32>, vector<32x128xf32>, vector<8x128xf32> -> vector<8x128xf32>
    %4 = vector.broadcast %2 : vector<1x128xf32> to vector<8x128xf32>
    %5 = arith.addf %3, %4 : vector<8x128xf32>
    %cst_5 = arith.constant 0.000000e+00 : f32
    %6 = vector.broadcast %cst_5 : f32 to vector<8x128xf32>
    %7 = arith.maximumf %5, %6 : vector<8x128xf32>
    %c0_6 = arith.constant 0 : index
    %c0_7 = arith.constant 0 : index
    %8 = vector.load %arg4[%c0_6, %c0_7] : memref<128x128xf32, #tpu.memory_space<vmem>>, vector<128x128xf32>
    %c0_8 = arith.constant 0 : index
    %c0_9 = arith.constant 0 : index
    %9 = vector.load %arg5[%c0_8, %c0_9] : memref<1x128xf32, #tpu.memory_space<vmem>>, vector<1x128xf32>
    %cst_10 = arith.constant dense<0.000000e+00> : vector<8x128xf32>
    %10 = tpu.matmul %7, %8, %cst_10 {dimension_numbers = #tpu.dot_dimension_numbers<[1], [0], [0], [1], [0, 0, 1, 1], [], []>} : vector<8x128xf32>, vector<128x128xf32>, vector<8x128xf32> -> vector<8x128xf32>
    %11 = vector.broadcast %9 : vector<1x128xf32> to vector<8x128xf32>
    %12 = arith.addf %10, %11 : vector<8x128xf32>
    %cst_11 = arith.constant 0.000000e+00 : f32
    %13 = vector.broadcast %cst_11 : f32 to vector<8x128xf32>
    %14 = arith.maximumf %12, %13 : vector<8x128xf32>
    %c0_12 = arith.constant 0 : index
    %c0_13 = arith.constant 0 : index
    %15 = vector.load %arg6[%c0_12, %c0_13] : memref<128x128xf32, #tpu.memory_space<vmem>>, vector<128x128xf32>
    %c0_14 = arith.constant 0 : index
    %c0_15 = arith.constant 0 : index
    %16 = vector.load %arg7[%c0_14, %c0_15] : memref<1x128xf32, #tpu.memory_space<vmem>>, vector<1x128xf32>
    %cst_16 = arith.constant dense<0.000000e+00> : vector<8x128xf32>
    %17 = tpu.matmul %14, %15, %cst_16 {dimension_numbers = #tpu.dot_dimension_numbers<[1], [0], [0], [1], [0, 0, 1, 1], [], []>} : vector<8x128xf32>, vector<128x128xf32>, vector<8x128xf32> -> vector<8x128xf32>
    %18 = vector.broadcast %16 : vector<1x128xf32> to vector<8x128xf32>
    %19 = arith.addf %17, %18 : vector<8x128xf32>
    %c0_17 = arith.constant 0 : index
    %c0_18 = arith.constant 0 : index
    %20 = vector.load %arg8[%c0_17, %c0_18] : memref<8x128xf32, #tpu.memory_space<vmem>>, vector<8x128xf32>
    tpu.vector_store %arg8[%c0_17, %c0_18], %19 {strides = array<i32>} : memref<8x128xf32, #tpu.memory_space<vmem>>, vector<8x128xf32>,
    return
  }
  func.func @transform_0(%arg0: i32) -> (i32, i32) {
    %c0_i32 = arith.constant 0 : i32
    %c0_i32_0 = arith.constant 0 : i32
    return %arg0, %c0_i32 : i32, i32
  }
  func.func @transform_1(%arg0: i32) -> (i32, i32) {
    %c0_i32 = arith.constant 0 : i32
    %c0_i32_0 = arith.constant 0 : i32
    %c0_i32_1 = arith.constant 0 : i32
    return %c0_i32, %c0_i32_0 : i32, i32
  }
  func.func @transform_2(%arg0: i32) -> (i32, i32) {
    %c0_i32 = arith.constant 0 : i32
    %c0_i32_0 = arith.constant 0 : i32
    %c0_i32_1 = arith.constant 0 : i32
    return %c0_i32, %c0_i32_0 : i32, i32
  }
  func.func @transform_3(%arg0: i32) -> (i32, i32) {
    %c0_i32 = arith.constant 0 : i32
    %c0_i32_0 = arith.constant 0 : i32
    %c0_i32_1 = arith.constant 0 : i32
    return %c0_i32, %c0_i32_0 : i32, i32
  }
  func.func @transform_4(%arg0: i32) -> (i32, i32) {
    %c0_i32 = arith.constant 0 : i32
    %c0_i32_0 = arith.constant 0 : i32
    %c0_i32_1 = arith.constant 0 : i32
    return %c0_i32, %c0_i32_0 : i32, i32
  }
  func.func @transform_5(%arg0: i32) -> (i32, i32) {
    %c0_i32 = arith.constant 0 : i32
    %c0_i32_0 = arith.constant 0 : i32
    %c0_i32_1 = arith.constant 0 : i32
    return %c0_i32, %c0_i32_0 : i32, i32
  }
  func.func @transform_6(%arg0: i32) -> (i32, i32) {
    %c0_i32 = arith.constant 0 : i32
    %c0_i32_0 = arith.constant 0 : i32
    %c0_i32_1 = arith.constant 0 : i32
    return %c0_i32, %c0_i32_0 : i32, i32
  }
  func.func @transform_7(%arg0: i32) -> (i32, i32) {
    %c0_i32 = arith.constant 0 : i32
    %c0_i32_0 = arith.constant 0 : i32
    return %arg0, %c0_i32 : i32, i32
  }
}

</mosaic_0001>

<llo_original>
// kernel: projection_forward.1
$region0: #{projection_forward.1}
  #allocation0 [shape = 'u32[]', space=smem, size = 0x4, offset = 0x4, fixed_abs, tag = 'smem constant byte address 0x4 - core index']
  #allocation1 [shape = 'u32[144,128]{1,0:T(1,128)}', space=vmem, size = 0x12000, scoped, tag = 'internal scratch']
  %s0 = inlined_call_operand.hbm [shape: f32[8,32], index: 0, kind: input, shape index: {}]
  %s1 = inlined_call_operand.hbm [shape: f32[32,128], index: 1, kind: input, shape index: {}]
  %s2 = inlined_call_operand.vmem [shape: f32[1,128], index: 2, kind: input, shape index: {}]
  %s3 = inlined_call_operand.hbm [shape: f32[128,128], index: 3, kind: input, shape index: {}]
  %s4 = inlined_call_operand.vmem [shape: f32[1,128], index: 4, kind: input, shape index: {}]
  %s5 = inlined_call_operand.hbm [shape: f32[128,128], index: 5, kind: input, shape index: {}]
  %s6 = inlined_call_operand.vmem [shape: f32[1,128], index: 6, kind: input, shape index: {}]
  %s7 = inlined_call_operand.hbm [shape: f32[8,128], index: 7, kind: output, shape index: {}]
  %s8 = sld [smem:[#allocation0]]
  $region54: #{projection_forward.1} parent=0
    _
  %s10 = ssub.s32 1, %s8
  %s11 = scalar_select 0, %s10, %s8
  $region1: #{projection_forward.1} parent=0
    #allocation2 [shape = 'u8[4096]{0}', space=vmem, size = 0x1000, scoped, tag = 'input window, operand 0, single buffered']
    #allocation3 [shape = 's32[1]{0}', space=sflag, size = 0x4, scoped, tag = 'scoped memory for projection_forward.1']
    #allocation4 [shape = 's32[1]{0}', space=sflag, size = 0x4, scoped, tag = 'scoped memory for projection_forward.1']
    #allocation5 [shape = 'u8[16384]{0}', space=vmem, size = 0x4000, scoped, tag = 'input window, operand 1, single buffered']
    #allocation6 [shape = 's32[1]{0}', space=sflag, size = 0x4, scoped, tag = 'scoped memory for projection_forward.1']
    #allocation7 [shape = 'u8[65536]{0}', space=vmem, size = 0x10000, scoped, tag = 'input window, operand 3, single buffered']
    #allocation8 [shape = 'u8[65536]{0}', space=vmem, size = 0x10000, scoped, tag = 'input window, operand 5, single buffered']
    #allocation9 [shape = 's32[1]{0}', space=sflag, size = 0x4, scoped, tag = 'scoped memory for projection_forward.1']
    #allocation10 [shape = 'u8[4096]{0}', space=vmem, size = 0x1000, scoped, tag = 'output window, operand 0, single buffered']
    %12 = vsyncpa [#allocation3], 0
    %13 = vsyncpa [#allocation6], 0
    %14 = vsyncpa [#allocation9], 0
    %15 = vsyncpa [#allocation4], 0
    // Predicated region
    $region2: #{projection_forward.1} parent=1 // pred_check
      _
    $region3: #{projection_forward.1} parent=1 // pred_check_branch
      %17 = sbr.rel (0) target = $region5
    $region4: #{projection_forward.1} parent=1 // pred_region
      %s19 = ssub.s32 128, 128
      %20 = vsyncadd [#allocation3], %s19
      %s22 = sshll.u32 [#allocation2], 4
      %s23 = int_to_ptr.vmem [resolvable:$true] %s22
      %25 = dma.hbm_to_vmem [thread:$0]  %s0, 128, %s23, [#allocation3]
    $region5: #{projection_forward.1} parent=1 // pred_fallthru
      _
    // Predicated region
    $region6: #{projection_forward.1} parent=1 // pred_check
      _
    $region7: #{projection_forward.1} parent=1 // pred_check_branch
      %27 = sbr.rel (0) target = $region9
    $region8: #{projection_forward.1} parent=1 // pred_region
      %s29 = ssub.s32 512, 512
      %30 = vsyncadd [#allocation6], %s29
      %s31 = sshll.u32 [#allocation5], 4
      %s32 = int_to_ptr.vmem [resolvable:$true] %s31
      %37 = dma.hbm_to_vmem [thread:$0]  %s1, 512, %s32, [#allocation6], 128, 128, 8
    $region9: #{projection_forward.1} parent=1 // pred_fallthru
      _
    // Predicated region
    $region10: #{projection_forward.1} parent=1 // pred_check
      _
    $region11: #{projection_forward.1} parent=1 // pred_check_branch
      %39 = sbr.rel (0) target = $region13
    $region12: #{projection_forward.1} parent=1 // pred_region
      _
    $region13: #{projection_forward.1} parent=1 // pred_fallthru
      _
    // Predicated region
    $region14: #{projection_forward.1} parent=1 // pred_check
      _
    $region15: #{projection_forward.1} parent=1 // pred_check_branch
      %41 = sbr.rel (0) target = $region17
    $region16: #{projection_forward.1} parent=1 // pred_region
      %s43 = ssub.s32 2048, 2048
      %44 = vsyncadd [#allocation6], %s43
      %s45 = sshll.u32 [#allocation7], 4
      %s46 = int_to_ptr.vmem [resolvable:$true] %s45
      %51 = dma.hbm_to_vmem [thread:$0]  %s3, 2048, %s46, [#allocation6], 128, 128, 8
    $region17: #{projection_forward.1} parent=1 // pred_fallthru
      _
    // Predicated region
    $region18: #{projection_forward.1} parent=1 // pred_check
      _
    $region19: #{projection_forward.1} parent=1 // pred_check_branch
      %53 = sbr.rel (0) target = $region21
    $region20: #{projection_forward.1} parent=1 // pred_region
      _
    $region21: #{projection_forward.1} parent=1 // pred_fallthru
      _
    // Predicated region
    $region22: #{projection_forward.1} parent=1 // pred_check
      _
    $region23: #{projection_forward.1} parent=1 // pred_check_branch
      %55 = sbr.rel (0) target = $region25
    $region24: #{projection_forward.1} parent=1 // pred_region
      %s57 = ssub.s32 2048, 2048
      %58 = vsyncadd [#allocation9], %s57
      %s59 = sshll.u32 [#allocation8], 4
      %s60 = int_to_ptr.vmem [resolvable:$true] %s59
      %65 = dma.hbm_to_vmem [thread:$0]  %s5, 2048, %s60, [#allocation9], 128, 128, 8
    $region25: #{projection_forward.1} parent=1 // pred_fallthru
      _
    // Predicated region
    $region26: #{projection_forward.1} parent=1 // pred_check
      _
    $region27: #{projection_forward.1} parent=1 // pred_check_branch
      %67 = sbr.rel (0) target = $region29
    $region28: #{projection_forward.1} parent=1 // pred_region
      _
    $region29: #{projection_forward.1} parent=1 // pred_fallthru
      _
    // Predicated region
    $region30: #{projection_forward.1} parent=1 // pred_check
      _
    $region31: #{projection_forward.1} parent=1 // pred_check_branch
      %69 = sbr.rel (0) target = $region33
    $region32: #{projection_forward.1} parent=1 // pred_region
      %70 = dma.done [#allocation3], 128
    $region33: #{projection_forward.1} parent=1 // pred_fallthru
      _
    // Predicated region
    $region34: #{projection_forward.1} parent=1 // pred_check
      _
    $region35: #{projection_forward.1} parent=1 // pred_check_branch
      %72 = sbr.rel (0) target = $region37
    $region36: #{projection_forward.1} parent=1 // pred_region
      %73 = dma.done [#allocation6], 512
    $region37: #{projection_forward.1} parent=1 // pred_fallthru
      _
    // Predicated region
    $region38: #{projection_forward.1} parent=1 // pred_check
      _
    $region39: #{projection_forward.1} parent=1 // pred_check_branch
      %75 = sbr.rel (0) target = $region41
    $region40: #{projection_forward.1} parent=1 // pred_region
      %76 = dma.done [#allocation6], 2048
    $region41: #{projection_forward.1} parent=1 // pred_fallthru
      _
    // Predicated region
    $region42: #{projection_forward.1} parent=1 // pred_check
      _
    $region43: #{projection_forward.1} parent=1 // pred_check_branch
      %78 = sbr.rel (0) target = $region45
    $region44: #{projection_forward.1} parent=1 // pred_region
      %79 = dma.done [#allocation9], 2048
    $region45: #{projection_forward.1} parent=1 // pred_fallthru
      _
    %v80 = vld [vmem:[#allocation2] sm:$0xff]
    %v81 = vld [vmem:[#allocation5] sm:$0xff]
    %v82 = vld [vmem:[#allocation5 + $0x8] sm:$0xff]
    %v83 = vld [vmem:[#allocation5 + $0x10] sm:$0xff]
    %v84 = vld [vmem:[#allocation5 + $0x18] sm:$0xff]
    %v85 = vld [vmem:[%s2] sm:$0x1]
    %v87 = vlaneseq
    %v88 = vshrl.u32 %v87, 7
    %v89 = vsub.s32 0, %v88
    %v90 = vrot.slane %v85, %v89
    %vm92 = vcmask 261120
    %v94 = vsel %vm92, %v80, 0
    %96 = vmatprep.subr.mxu0 0.0
    %97 = vmatpush1.msra.mxu0 %v81
    %98 = vmatprep.subr.mxu0 0.0
    %99 = vmatpush1.msra.mxu0 %v82
    %100 = vmatprep.subr.mxu0 0.0
    %101 = vmatpush1.msra.mxu0 %v83
    %102 = vmatprep.subr.mxu0 0.0
    %103 = vmatpush1.msra.mxu0 %v84
    %104 = vmatprep.subr.mxu0 0.0
    %105 = vmatpush1.msra.mxu0 0.0
    %106 = vmatprep.subr.mxu0 0.0
    %107 = vmatpush1.msra.mxu0 0.0
    %108 = vmatprep.subr.mxu0 0.0
    %109 = vmatpush1.msra.mxu0 0.0
    %110 = vmatprep.subr.mxu0 0.0
    %111 = vmatpush1.msra.mxu0 0.0
    %112 = vmatprep.subr.mxu0 0.0
    %113 = vmatpush1.msra.mxu0 0.0
    %114 = vmatprep.subr.mxu0 0.0
    %115 = vmatpush1.msra.mxu0 0.0
    %116 = vmatprep.subr.mxu0 0.0
    %117 = vmatpush1.msra.mxu0 0.0
    %118 = vmatprep.subr.mxu0 0.0
    %119 = vmatpush1.msra.mxu0 0.0
    %120 = vmatprep.subr.mxu0 0.0
    %121 = vmatpush1.msra.mxu0 0.0
    %122 = vmatprep.subr.mxu0 0.0
    %123 = vmatpush1.msra.mxu0 0.0
    %124 = vmatprep.subr.mxu0 0.0
    %125 = vmatpush1.msra.mxu0 0.0
    %126 = vmatprep.subr.mxu0 0.0
    %127 = vmatpush1.msra.mxu0 0.0
    %128 = vmatprep.subr.mxu0 0.0
    %129 = vmatpush1.msra.mxu0 0.0
    %130 = vmatprep.subr.mxu0 0.0
    %131 = vmatpush1.msra.mxu0 0.0
    %132 = vmatprep.subr.mxu0 0.0
    %133 = vmatpush1.msra.mxu0 0.0
    %134 = vmatprep.subr.mxu0 0.0
    %135 = vmatpush1.msra.mxu0 0.0
    %136 = vmatprep.subr.mxu0 0.0
    %137 = vmatpush1.msra.mxu0 0.0
    %138 = vmatprep.subr.mxu0 0.0
    %139 = vmatpush1.msra.mxu0 0.0
    %140 = vmatprep.subr.mxu0 0.0
    %141 = vmatpush1.msra.mxu0 0.0
    %142 = vmatprep.subr.mxu0 0.0
    %143 = vmatpush1.msra.mxu0 0.0
    %144 = vmatprep.subr.mxu0 0.0
    %145 = vmatpush1.msra.mxu0 0.0
    %146 = vmatprep.subr.mxu0 0.0
    %147 = vmatpush1.msra.mxu0 0.0
    %148 = vmatprep.subr.mxu0 0.0
    %149 = vmatpush1.msra.mxu0 0.0
    %150 = vmatprep.subr.mxu0 0.0
    %151 = vmatpush1.msra.mxu0 0.0
    %152 = vmatprep.subr.mxu0 0.0
    %153 = vmatpush1.msra.mxu0 0.0
    %154 = vmatprep.subr.mxu0 0.0
    %155 = vmatpush1.msra.mxu0 0.0
    %156 = vmatprep.subr.mxu0 0.0
    %157 = vmatpush1.msra.mxu0 0.0
    %158 = vmatprep.subr.mxu0 0.0
    %159 = vmatpush1.msra.mxu0 0.0
    %160 = vmatprep.mubr.f32.mxu0 0.0
    %161 = vmatmul.mubr.f32.gmra.mrb[0].mxu0 %v94
    %v162 = vpop.f32.mrb[0].mxu0
    %v163 = vadd.f32 %v90, %v162
    %v164 = vpop.f32.mrb[0].mxu0
    %165 = vdwg.mxu0
    %v166 = vmax.f32 %v163, 0.0
    %v167 = vld [vmem:[#allocation7] sm:$0xff]
    %v168 = vld [vmem:[#allocation7 + $0x8] sm:$0xff]
    %v169 = vld [vmem:[#allocation7 + $0x10] sm:$0xff]
    %v170 = vld [vmem:[#allocation7 + $0x18] sm:$0xff]
    %v171 = vld [vmem:[#allocation7 + $0x20] sm:$0xff]
    %v172 = vld [vmem:[#allocation7 + $0x28] sm:$0xff]
    %v173 = vld [vmem:[#allocation7 + $0x30] sm:$0xff]
    %v174 = vld [vmem:[#allocation7 + $0x38] sm:$0xff]
    %v175 = vld [vmem:[#allocation7 + $0x40] sm:$0xff]
    %v176 = vld [vmem:[#allocation7 + $0x48] sm:$0xff]
    %v177 = vld [vmem:[#allocation7 + $0x50] sm:$0xff]
    %v178 = vld [vmem:[#allocation7 + $0x58] sm:$0xff]
    %v179 = vld [vmem:[#allocation7 + $0x60] sm:$0xff]
    %v180 = vld [vmem:[#allocation7 + $0x68] sm:$0xff]
    %v181 = vld [vmem:[#allocation7 + $0x70] sm:$0xff]
    %v182 = vld [vmem:[#allocation7 + $0x78] sm:$0xff]
    %v183 = vld [vmem:[%s4] sm:$0x1]
    %v185 = vlaneseq
    %v186 = vshrl.u32 %v185, 7
    %v187 = vsub.s32 0, %v186
    %v188 = vrot.slane %v183, %v187
    %190 = vmatprep.subr.mxu0 0.0
    %191 = vmatpush1.msra.mxu0 %v167
    %192 = vmatprep.subr.mxu0 0.0
    %193 = vmatpush1.msra.mxu0 %v168
    %194 = vmatprep.subr.mxu0 0.0
    %195 = vmatpush1.msra.mxu0 %v169
    %196 = vmatprep.subr.mxu0 0.0
    %197 = vmatpush1.msra.mxu0 %v170
    %198 = vmatprep.subr.mxu0 0.0
    %199 = vmatpush1.msra.mxu0 %v171
    %200 = vmatprep.subr.mxu0 0.0
    %201 = vmatpush1.msra.mxu0 %v172
    %202 = vmatprep.subr.mxu0 0.0
    %203 = vmatpush1.msra.mxu0 %v173
    %204 = vmatprep.subr.mxu0 0.0
    %205 = vmatpush1.msra.mxu0 %v174
    %206 = vmatprep.subr.mxu0 0.0
    %207 = vmatpush1.msra.mxu0 %v175
    %208 = vmatprep.subr.mxu0 0.0
    %209 = vmatpush1.msra.mxu0 %v176
    %210 = vmatprep.subr.mxu0 0.0
    %211 = vmatpush1.msra.mxu0 %v177
    %212 = vmatprep.subr.mxu0 0.0
    %213 = vmatpush1.msra.mxu0 %v178
    %214 = vmatprep.subr.mxu0 0.0
    %215 = vmatpush1.msra.mxu0 %v179
    %216 = vmatprep.subr.mxu0 0.0
    %217 = vmatpush1.msra.mxu0 %v180
    %218 = vmatprep.subr.mxu0 0.0
    %219 = vmatpush1.msra.mxu0 %v181
    %220 = vmatprep.subr.mxu0 0.0
    %221 = vmatpush1.msra.mxu0 %v182
    %222 = vmatprep.subr.mxu0 0.0
    %223 = vmatpush1.msra.mxu0 0.0
    %224 = vmatprep.subr.mxu0 0.0
    %225 = vmatpush1.msra.mxu0 0.0
    %226 = vmatprep.subr.mxu0 0.0
    %227 = vmatpush1.msra.mxu0 0.0
    %228 = vmatprep.subr.mxu0 0.0
    %229 = vmatpush1.msra.mxu0 0.0
    %230 = vmatprep.subr.mxu0 0.0
    %231 = vmatpush1.msra.mxu0 0.0
    %232 = vmatprep.subr.mxu0 0.0
    %233 = vmatpush1.msra.mxu0 0.0
    %234 = vmatprep.subr.mxu0 0.0
    %235 = vmatpush1.msra.mxu0 0.0
    %236 = vmatprep.subr.mxu0 0.0
    %237 = vmatpush1.msra.mxu0 0.0
    %238 = vmatprep.subr.mxu0 0.0
    %239 = vmatpush1.msra.mxu0 0.0
    %240 = vmatprep.subr.mxu0 0.0
    %241 = vmatpush1.msra.mxu0 0.0
    %242 = vmatprep.subr.mxu0 0.0
    %243 = vmatpush1.msra.mxu0 0.0
    %244 = vmatprep.subr.mxu0 0.0
    %245 = vmatpush1.msra.mxu0 0.0
    %246 = vmatprep.subr.mxu0 0.0
    %247 = vmatpush1.msra.mxu0 0.0
    %248 = vmatprep.subr.mxu0 0.0
    %249 = vmatpush1.msra.mxu0 0.0
    %250 = vmatprep.subr.mxu0 0.0
    %251 = vmatpush1.msra.mxu0 0.0
    %252 = vmatprep.subr.mxu0 0.0
    %253 = vmatpush1.msra.mxu0 0.0
    %254 = vmatprep.mubr.f32.mxu0 0.0
    %255 = vmatmul.mubr.f32.gmra.mrb[0].mxu0 %v166
    %v256 = vpop.f32.mrb[0].mxu0
    %v257 = vadd.f32 %v188, %v256
    %v258 = vpop.f32.mrb[0].mxu0
    %259 = vdwg.mxu0
    %v260 = vmax.f32 %v257, 0.0
    %v261 = vld [vmem:[#allocation8] sm:$0xff]
    %v262 = vld [vmem:[#allocation8 + $0x8] sm:$0xff]
    %v263 = vld [vmem:[#allocation8 + $0x10] sm:$0xff]
    %v264 = vld [vmem:[#allocation8 + $0x18] sm:$0xff]
    %v265 = vld [vmem:[#allocation8 + $0x20] sm:$0xff]
    %v266 = vld [vmem:[#allocation8 + $0x28] sm:$0xff]
    %v267 = vld [vmem:[#allocation8 + $0x30] sm:$0xff]
    %v268 = vld [vmem:[#allocation8 + $0x38] sm:$0xff]
    %v269 = vld [vmem:[#allocation8 + $0x40] sm:$0xff]
    %v270 = vld [vmem:[#allocation8 + $0x48] sm:$0xff]
    %v271 = vld [vmem:[#allocation8 + $0x50] sm:$0xff]
    %v272 = vld [vmem:[#allocation8 + $0x58] sm:$0xff]
    %v273 = vld [vmem:[#allocation8 + $0x60] sm:$0xff]
    %v274 = vld [vmem:[#allocation8 + $0x68] sm:$0xff]
    %v275 = vld [vmem:[#allocation8 + $0x70] sm:$0xff]
    %v276 = vld [vmem:[#allocation8 + $0x78] sm:$0xff]
    %v277 = vld [vmem:[%s6] sm:$0x1]
    %v279 = vlaneseq
    %v280 = vshrl.u32 %v279, 7
    %v281 = vsub.s32 0, %v280
    %v282 = vrot.slane %v277, %v281
    %284 = vmatprep.subr.mxu0 0.0
    %285 = vmatpush1.msra.mxu0 %v261
    %286 = vmatprep.subr.mxu0 0.0
    %287 = vmatpush1.msra.mxu0 %v262
    %288 = vmatprep.subr.mxu0 0.0
    %289 = vmatpush1.msra.mxu0 %v263
    %290 = vmatprep.subr.mxu0 0.0
    %291 = vmatpush1.msra.mxu0 %v264
    %292 = vmatprep.subr.mxu0 0.0
    %293 = vmatpush1.msra.mxu0 %v265
    %294 = vmatprep.subr.mxu0 0.0
    %295 = vmatpush1.msra.mxu0 %v266
    %296 = vmatprep.subr.mxu0 0.0
    %297 = vmatpush1.msra.mxu0 %v267
    %298 = vmatprep.subr.mxu0 0.0
    %299 = vmatpush1.msra.mxu0 %v268
    %300 = vmatprep.subr.mxu0 0.0
    %301 = vmatpush1.msra.mxu0 %v269
    %302 = vmatprep.subr.mxu0 0.0
    %303 = vmatpush1.msra.mxu0 %v270
    %304 = vmatprep.subr.mxu0 0.0
    %305 = vmatpush1.msra.mxu0 %v271
    %306 = vmatprep.subr.mxu0 0.0
    %307 = vmatpush1.msra.mxu0 %v272
    %308 = vmatprep.subr.mxu0 0.0
    %309 = vmatpush1.msra.mxu0 %v273
    %310 = vmatprep.subr.mxu0 0.0
    %311 = vmatpush1.msra.mxu0 %v274
    %312 = vmatprep.subr.mxu0 0.0
    %313 = vmatpush1.msra.mxu0 %v275
    %314 = vmatprep.subr.mxu0 0.0
    %315 = vmatpush1.msra.mxu0 %v276
    %316 = vmatprep.subr.mxu0 0.0
    %317 = vmatpush1.msra.mxu0 0.0
    %318 = vmatprep.subr.mxu0 0.0
    %319 = vmatpush1.msra.mxu0 0.0
    %320 = vmatprep.subr.mxu0 0.0
    %321 = vmatpush1.msra.mxu0 0.0
    %322 = vmatprep.subr.mxu0 0.0
    %323 = vmatpush1.msra.mxu0 0.0
    %324 = vmatprep.subr.mxu0 0.0
    %325 = vmatpush1.msra.mxu0 0.0
    %326 = vmatprep.subr.mxu0 0.0
    %327 = vmatpush1.msra.mxu0 0.0
    %328 = vmatprep.subr.mxu0 0.0
    %329 = vmatpush1.msra.mxu0 0.0
    %330 = vmatprep.subr.mxu0 0.0
    %331 = vmatpush1.msra.mxu0 0.0
    %332 = vmatprep.subr.mxu0 0.0
    %333 = vmatpush1.msra.mxu0 0.0
    %334 = vmatprep.subr.mxu0 0.0
    %335 = vmatpush1.msra.mxu0 0.0
    %336 = vmatprep.subr.mxu0 0.0
    %337 = vmatpush1.msra.mxu0 0.0
    %338 = vmatprep.subr.mxu0 0.0
    %339 = vmatpush1.msra.mxu0 0.0
    %340 = vmatprep.subr.mxu0 0.0
    %341 = vmatpush1.msra.mxu0 0.0
    %342 = vmatprep.subr.mxu0 0.0
    %343 = vmatpush1.msra.mxu0 0.0
    %344 = vmatprep.subr.mxu0 0.0
    %345 = vmatpush1.msra.mxu0 0.0
    %346 = vmatprep.subr.mxu0 0.0
    %347 = vmatpush1.msra.mxu0 0.0
    %348 = vmatprep.mubr.f32.mxu0 0.0
    %349 = vmatmul.mubr.f32.gmra.mrb[0].mxu0 %v260
    %v350 = vpop.f32.mrb[0].mxu0
    %v351 = vadd.f32 %v282, %v350
    %v352 = vpop.f32.mrb[0].mxu0
    %353 = vdwg.mxu0
    %354 = vst [vmem:[#allocation10] sm:$0xff] %v351
    // Predicated region
    $region46: #{projection_forward.1} parent=1 // pred_check
      _
    $region47: #{projection_forward.1} parent=1 // pred_check_branch
      %356 = sbr.rel (0) target = $region49
    $region48: #{projection_forward.1} parent=1 // pred_region
      %s358 = ssub.s32 128, 128
      %359 = vsyncadd [#allocation4], %s358
      %s361 = sshll.u32 [#allocation10], 4
      %s362 = int_to_ptr.vmem [resolvable:$true] %s361
      %364 = dma.vmem_to_hbm [thread:$0]  %s362, 128, %s7, [#allocation4]
    $region49: #{projection_forward.1} parent=1 // pred_fallthru
      _
    // Predicated region
    $region50: #{projection_forward.1} parent=1 // pred_check
      _
    $region51: #{projection_forward.1} parent=1 // pred_check_branch
      %366 = sbr.rel (0) target = $region53
    $region52: #{projection_forward.1} parent=1 // pred_region
      %367 = dma.done [#allocation4], 128
    $region53: #{projection_forward.1} parent=1 // pred_fallthru
      _
    %368 = vsyncpa [#allocation3], 1
    %369 = vsyncpa [#allocation6], 1
    %370 = vsyncpa [#allocation9], 1
    %371 = vsyncpa [#allocation4], 1

</llo_original>
